<compile_context>
chip_gen: v7x
topology: tpu7x:2x2x1
jax: 0.10.0
libtpu: 0.0.40
codegen_flags: <defaults>
</compile_context>

<pallas_src>
import jax
import jax.numpy as jnp
from jax import lax
from jax.experimental import pallas as pl
from jax.experimental.pallas import tpu as pltpu


_MAX_TILE_L = 32768   # cap on the lane-tile width (keeps in-kernel values reasonable)
_MAX_TILE_B = 8       # batch block is statically unrolled inside the kernel


def _round_up(a, b):
    return ((a + b - 1) // b) * b


def _vmem_budget():
    """(working-set budget, scoped vmem limit) sized per TPU generation."""
    try:
        cap = pltpu.get_tpu_info().vmem_capacity_bytes
    except Exception:
        cap = 64 * 1024 * 1024                       # assume v7x (smallest VMEM)
    limit = min(cap // 2, 64 * 1024 * 1024)          # 32 MiB on v7x, 64 MiB on v5e/v6e
    return (limit * 3) // 4, limit                   # headroom for Mosaic scratch


def _pick_tiles(B, Cin, Cout_p, K, l_full, itemsize, budget):
    """Largest (TILE_B, TILE_L) whose double-buffered working set fits `budget`."""
    def step_bytes(tb, tl):
        dbuf = 2 * tb * (Cin + Cout_p) * tl * itemsize   # pipelined x / out blocks
        tmp = (3 * Cin + 2 * Cout_p) * tl * 4            # rolled copies + f32 accumulator
        wgt = 2 * (K * Cout_p * Cin + Cout_p) * 4        # weights + bias
        return dbuf + tmp + wgt

    tile_b = 1
    for tb in range(min(B, _MAX_TILE_B), 0, -1):         # largest divisor of B <= cap
        if B % tb == 0:
            tile_b = tb
            break

    n_l = max(1, pl.cdiv(l_full, _MAX_TILE_L))
    tile_l = _round_up(pl.cdiv(l_full, n_l), 128)
    while step_bytes(tile_b, tile_l) > budget and tile_l > 128:
        n_l += 1
        tile_l = _round_up(pl.cdiv(l_full, n_l), 128)
    while step_bytes(tile_b, tile_l) > budget and tile_b > 1:
        tile_b -= 1
        while B % tile_b:
            tile_b -= 1
    return tile_b, tile_l


def _conv1d_kernel(x_ref, h_ref, w_ref, b_ref, o_ref):
    # x_ref: (TILE_B, Cin, TILE_L)    current L tile of the zero-padded input (NCL)
    # h_ref: (TILE_B, KH, Cin, 1)     the K-1 columns just right of this tile (halo)
    # w_ref: (K, Cout_p, Cin)         conv weights, tap-major
    # b_ref: (Cout_p, 1)              bias (f32)
    # o_ref: (TILE_B, Cout_p, TILE_L) output tile, NCL, lane-dense
    tile_b, c_in, tile_l = x_ref.shape
    k_size = w_ref.shape[0]
    lane = lax.broadcasted_iota(jnp.int32, (c_in, tile_l), 1)
    bias = b_ref[...].astype(jnp.float32)
    for b in range(tile_b):                            # small static unroll (<= 8)
        xt = x_ref[b]                                  # (Cin, TILE_L)
        acc = jnp.dot(w_ref[0], xt, preferred_element_type=jnp.float32)
        for k in range(1, k_size):
            # Shift left by k along L (lane axis) via an XLU rotate; the k wrapped
            # lanes at the right edge are patched with the true halo columns.
            z = pltpu.roll(xt, shift=tile_l - k, axis=1)
            for d in range(k):
                z = jnp.where(lane == tile_l - k + d, h_ref[b, d], z)
            acc = acc + jnp.dot(w_ref[k], z, preferred_element_type=jnp.float32)
        o_ref[b] = (acc + bias).astype(o_ref.dtype)


def general_conv1d_forward(x, weight, bias, *, stride=1, padding=1):
    """Conv1d(k=K, stride=1, padding=p, zeros pad, bias) forward via Pallas.

    x:      (B, Cin, L)      -- PyTorch NCL layout (kept throughout)
    weight: (Cout, Cin, K)   -- PyTorch Conv1d weight layout
    bias:   (Cout,)
    returns (B, Cout, L_out)
    """
    # TODO(synk): only stride=1 and pad_type='zeros' (the module defaults) are
    # implemented; other strides / padding modes are not translated.
    assert stride == 1, "only stride=1 implemented (module default)"
    B, Cin, L = x.shape
    Cout, Cin_w, K = weight.shape
    assert Cin_w == Cin
    assert K <= 128, "kernel size must be <= 128"
    L_out = L + 2 * padding - K + 1
    assert L_out >= 1

    itemsize = jnp.dtype(x.dtype).itemsize
    Cout_p = _round_up(Cout, 8)                       # sublane-aligned output channels
    l_full = _round_up(L_out, 128)

    budget, vmem_limit = _vmem_budget()
    TILE_B, TILE_L = _pick_tiles(B, Cin, Cout_p, K, l_full, itemsize, budget)
    n_l = pl.cdiv(L_out, TILE_L)
    n_b = B // TILE_B
    L_pad = n_l * TILE_L
    KH = max(K - 1, 1)
    Lp = L_pad + KH                                    # padded input length

    # One zero-pad of x (left = conv padding, right = conv padding + tile round-up).
    x_p = jnp.pad(x, ((0, 0), (0, 0), (padding, Lp - L - padding)))   # (B, Cin, Lp)

    # Tiny halo operand: for each L tile j, the KH columns starting at (j+1)*TILE_L,
    # laid out so the kernel reads them as aligned (Cin, 1) blocks.
    pos = (jnp.arange(1, n_l + 1, dtype=jnp.int32) * TILE_L)[:, None] \
        + jnp.arange(KH, dtype=jnp.int32)[None, :]                    # (n_l, KH)
    halo = jnp.take(x_p, pos.reshape(-1), axis=2)                     # (B, Cin, n_l*KH)
    halo = jnp.transpose(halo, (0, 2, 1))[..., None]                  # (B, n_l*KH, Cin, 1)

    # Weights tap-major with sublane-padded Cout; bias kept in f32 for the epilogue add.
    w_t = jnp.transpose(weight, (2, 0, 1))                            # (K, Cout, Cin)
    if Cout_p != Cout:
        w_t = jnp.pad(w_t, ((0, 0), (0, Cout_p - Cout), (0, 0)))
    bias_p = bias.astype(jnp.float32)
    if Cout_p != Cout:
        bias_p = jnp.pad(bias_p, (0, Cout_p - Cout))
    bias_p = bias_p.reshape(Cout_p, 1)

    cost = pl.CostEstimate(
        flops=2 * B * L_out * K * Cin * Cout,
        transcendentals=0,
        bytes_accessed=(B * Cin * Lp + K * Cout_p * Cin + B * Cout_p * L_pad) * itemsize,
    )

    out = pl.pallas_call(
        _conv1d_kernel,
        out_shape=jax.ShapeDtypeStruct((B, Cout_p, L_pad), x.dtype),
        grid_spec=pltpu.PrefetchScalarGridSpec(
            num_scalar_prefetch=0,
            grid=(n_l, n_b),                                   # longest parallel axis leads
            in_specs=[
                pl.BlockSpec((TILE_B, Cin, TILE_L), lambda j, nb: (nb, 0, j)),
                pl.BlockSpec((TILE_B, KH, Cin, 1), lambda j, nb: (nb, j, 0, 0)),
                pl.BlockSpec((K, Cout_p, Cin), lambda j, nb: (0, 0, 0)),
                pl.BlockSpec((Cout_p, 1), lambda j, nb: (0, 0)),
            ],
            out_specs=pl.BlockSpec((TILE_B, Cout_p, TILE_L), lambda j, nb: (nb, 0, j)),
        ),
        compiler_params=pltpu.CompilerParams(
            dimension_semantics=("parallel", "parallel"),
            vmem_limit_bytes=vmem_limit,
        ),
        cost_estimate=cost,
    )(x_p, halo, w_t, bias_p)

    return out[:, :Cout, :L_out]                                  # (B, Cout, L_out), NCL


if __name__ == "__main__":
    key = jax.random.PRNGKey(0)
    k_x, k_w, k_b = jax.random.split(key, 3)

    B, Cin, Cout, L, K = 2, 4, 8, 16, 3

    x = jax.random.normal(k_x, (B, Cin, L), dtype=jnp.float32)
    # Deterministic init mimicking PyTorch Conv1d default (uniform in +-1/sqrt(Cin*K))
    fan_in = Cin * K
    bound = 1.0 / (fan_in ** 0.5)
    weight = jax.random.uniform(k_w, (Cout, Cin, K), jnp.float32, -bound, bound)
    bias = jax.random.uniform(k_b, (Cout,), jnp.float32, -bound, bound)

    out = general_conv1d_forward(x, weight, bias, stride=1, padding=1)
    out = jax.block_until_ready(out)

    # Reference check against XLA's conv (NCL with explicit padding) + bias.
    ref = lax.conv_general_dilated(
        x, weight,
        window_strides=(1,),
        padding=((1, 1),),
        dimension_numbers=("NCH", "OIH", "NCH"),
    ) + bias[None, :, None]
    assert out.shape == (B, Cout, L)
    assert jnp.allclose(out, ref, atol=1e-5, rtol=1e-5), "mismatch vs reference"

    print("KERNEL_OK")
</pallas_src>

<mosaic_0001>
module attributes {stable_mosaic.version = 11 : i64} {
  func.func @_conv1d_kernel(%arg0: i32, %arg1: i32, %arg2: memref<2x4x128xf32, #tpu.memory_space<vmem>>, %arg3: memref<2x2x4x1xf32, #tpu.memory_space<vmem>>, %arg4: memref<3x8x4xf32, #tpu.memory_space<vmem>>, %arg5: memref<8x1xf32, #tpu.memory_space<vmem>>, %arg6: memref<2x8x128xf32, #tpu.memory_space<vmem>>) attributes {dimension_semantics = [#tpu.dimension_semantics<parallel>, #tpu.dimension_semantics<parallel>], iteration_bounds = array<i64: 1, 1>, scalar_prefetch = 0 : i64, scratch_operands = 0 : i64, tpu.core_type = #tpu.core_type<tc>, window_params = [{transform_indices = @transform_0, window_bounds = array<i64: 2, 4, 128>}, {transform_indices = @transform_1, window_bounds = array<i64: 2, 2, 4, 1>}, {pipeline_mode = #tpu.pipeline_mode<synchronous>, transform_indices = @transform_2, window_bounds = array<i64: 3, 8, 4>}, {pipeline_mode = #tpu.pipeline_mode<synchronous>, transform_indices = @transform_3, window_bounds = array<i64: 8, 1>}, {transform_indices = @transform_4, window_bounds = array<i64: 2, 8, 128>}]} {
    %0 = tpu.iota {dimensions = array<i32: 1>} : vector<4x128xi32>
    %c0 = arith.constant 0 : index
    %c0_0 = arith.constant 0 : index
    %1 = vector.load %arg5[%c0, %c0_0] : memref<8x1xf32, #tpu.memory_space<vmem>>, vector<8x1xf32>
    %c0_1 = arith.constant 0 : index
    %c0_2 = arith.constant 0 : index
    %c0_3 = arith.constant 0 : index
    %2 = vector.load %arg2[%c0_1, %c0_2, %c0_3] : memref<2x4x128xf32, #tpu.memory_space<vmem>>, vector<1x4x128xf32>
    %3 = vector.shape_cast %2 : vector<1x4x128xf32> to vector<4x128xf32>
    %c0_4 = arith.constant 0 : index
    %c0_5 = arith.constant 0 : index
    %c0_6 = arith.constant 0 : index
    %4 = vector.load %arg4[%c0_4, %c0_5, %c0_6] : memref<3x8x4xf32, #tpu.memory_space<vmem>>, vector<1x8x4xf32>
    %5 = vector.shape_cast %4 : vector<1x8x4xf32> to vector<8x4xf32>
    %cst = arith.constant dense<0.000000e+00> : vector<8x128xf32>
    %6 = tpu.matmul %5, %3, %cst {dimension_numbers = #tpu.dot_dimension_numbers<[1], [0], [0], [1], [0, 0, 1, 1], [], []>} : vector<8x4xf32>, vector<4x128xf32>, vector<8x128xf32> -> vector<8x128xf32>
    %c127_i32 = arith.constant 127 : i32
    %7 = tpu.dynamic_rotate %3 by %c127_i32 dim 1 : vector<4x128xf32>, i32 -> vector<4x128xf32>
    %c127_i32_7 = arith.constant 127 : i32
    %8 = vector.broadcast %c127_i32_7 : i32 to vector<4x128xi32>
    %9 = arith.cmpi eq, %0, %8 : vector<4x128xi32>
    %c0_8 = arith.constant 0 : index
    %c0_9 = arith.constant 0 : index
    %c0_10 = arith.constant 0 : index
    %c0_11 = arith.constant 0 : index
    %10 = vector.load %arg3[%c0_8, %c0_9, %c0_10, %c0_11] : memref<2x2x4x1xf32, #tpu.memory_space<vmem>>, vector<1x1x4x1xf32>
    %11 = vector.shape_cast %10 : vector<1x1x4x1xf32> to vector<4x1xf32>
    %12 = vector.shape_cast %11 : vector<4x1xf32> to vector<4x1xf32>
    %13 = vector.broadcast %12 : vector<4x1xf32> to vector<4x128xf32>
    %14 = arith.select %9, %13, %7 : vector<4x128xi1>, vector<4x128xf32>
    %c1 = arith.constant 1 : index
    %c0_12 = arith.constant 0 : index
    %c0_13 = arith.constant 0 : index
    %15 = vector.load %arg4[%c1, %c0_12, %c0_13] : memref<3x8x4xf32, #tpu.memory_space<vmem>>, vector<1x8x4xf32>
    %16 = vector.shape_cast %15 : vector<1x8x4xf32> to vector<8x4xf32>
    %cst_14 = arith.constant dense<0.000000e+00> : vector<8x128xf32>
    %17 = tpu.matmul %16, %14, %cst_14 {dimension_numbers = #tpu.dot_dimension_numbers<[1], [0], [0], [1], [0, 0, 1, 1], [], []>} : vector<8x4xf32>, vector<4x128xf32>, vector<8x128xf32> -> vector<8x128xf32>
    %18 = arith.addf %6, %17 : vector<8x128xf32>
    %c126_i32 = arith.constant 126 : i32
    %19 = tpu.dynamic_rotate %3 by %c126_i32 dim 1 : vector<4x128xf32>, i32 -> vector<4x128xf32>
    %c126_i32_15 = arith.constant 126 : i32
    %20 = vector.broadcast %c126_i32_15 : i32 to vector<4x128xi32>
    %21 = arith.cmpi eq, %0, %20 : vector<4x128xi32>
    %c0_16 = arith.constant 0 : index
    %c0_17 = arith.constant 0 : index
    %c0_18 = arith.constant 0 : index
    %c0_19 = arith.constant 0 : index
    %22 = vector.load %arg3[%c0_16, %c0_17, %c0_18, %c0_19] : memref<2x2x4x1xf32, #tpu.memory_space<vmem>>, vector<1x1x4x1xf32>
    %23 = vector.shape_cast %22 : vector<1x1x4x1xf32> to vector<4x1xf32>
    %24 = vector.shape_cast %23 : vector<4x1xf32> to vector<4x1xf32>
    %25 = vector.broadcast %24 : vector<4x1xf32> to vector<4x128xf32>
    %26 = arith.select %21, %25, %19 : vector<4x128xi1>, vector<4x128xf32>
    %c127_i32_20 = arith.constant 127 : i32
    %27 = vector.broadcast %c127_i32_20 : i32 to vector<4x128xi32>
    %28 = arith.cmpi eq, %0, %27 : vector<4x128xi32>
    %c0_21 = arith.constant 0 : index
    %c1_22 = arith.constant 1 : index
    %c0_23 = arith.constant 0 : index
    %c0_24 = arith.constant 0 : index
    %29 = vector.load %arg3[%c0_21, %c1_22, %c0_23, %c0_24] : memref<2x2x4x1xf32, #tpu.memory_space<vmem>>, vector<1x1x4x1xf32>
    %30 = vector.shape_cast %29 : vector<1x1x4x1xf32> to vector<4x1xf32>
    %31 = vector.shape_cast %30 : vector<4x1xf32> to vector<4x1xf32>
    %32 = vector.broadcast %31 : vector<4x1xf32> to vector<4x128xf32>
    %33 = arith.select %28, %32, %26 : vector<4x128xi1>, vector<4x128xf32>
    %c2 = arith.constant 2 : index
    %c0_25 = arith.constant 0 : index
    %c0_26 = arith.constant 0 : index
    %34 = vector.load %arg4[%c2, %c0_25, %c0_26] : memref<3x8x4xf32, #tpu.memory_space<vmem>>, vector<1x8x4xf32>
    %35 = vector.shape_cast %34 : vector<1x8x4xf32> to vector<8x4xf32>
    %cst_27 = arith.constant dense<0.000000e+00> : vector<8x128xf32>
    %36 = tpu.matmul %35, %33, %cst_27 {dimension_numbers = #tpu.dot_dimension_numbers<[1], [0], [0], [1], [0, 0, 1, 1], [], []>} : vector<8x4xf32>, vector<4x128xf32>, vector<8x128xf32> -> vector<8x128xf32>
    %37 = arith.addf %18, %36 : vector<8x128xf32>
    %38 = vector.broadcast %1 : vector<8x1xf32> to vector<8x128xf32>
    %39 = arith.addf %37, %38 : vector<8x128xf32>
    %c0_28 = arith.constant 0 : index
    %c0_29 = arith.constant 0 : index
    %c0_30 = arith.constant 0 : index
    %40 = vector.load %arg6[%c0_28, %c0_29, %c0_30] : memref<2x8x128xf32, #tpu.memory_space<vmem>>, vector<1x8x128xf32>
    %41 = vector.shape_cast %40 : vector<1x8x128xf32> to vector<8x128xf32>
    %42 = vector.shape_cast %39 : vector<8x128xf32> to vector<1x8x128xf32>
    tpu.vector_store %arg6[%c0_28, %c0_29, %c0_30], %42 {strides = array<i32>} : memref<2x8x128xf32, #tpu.memory_space<vmem>>, vector<1x8x128xf32>,
    %c1_31 = arith.constant 1 : index
    %c0_32 = arith.constant 0 : index
    %c0_33 = arith.constant 0 : index
    %43 = vector.load %arg2[%c1_31, %c0_32, %c0_33] : memref<2x4x128xf32, #tpu.memory_space<vmem>>, vector<1x4x128xf32>
    %44 = vector.shape_cast %43 : vector<1x4x128xf32> to vector<4x128xf32>
    %c0_34 = arith.constant 0 : index
    %c0_35 = arith.constant 0 : index
    %c0_36 = arith.constant 0 : index
    %45 = vector.load %arg4[%c0_34, %c0_35, %c0_36] : memref<3x8x4xf32, #tpu.memory_space<vmem>>, vector<1x8x4xf32>
    %46 = vector.shape_cast %45 : vector<1x8x4xf32> to vector<8x4xf32>
    %cst_37 = arith.constant dense<0.000000e+00> : vector<8x128xf32>
    %47 = tpu.matmul %46, %44, %cst_37 {dimension_numbers = #tpu.dot_dimension_numbers<[1], [0], [0], [1], [0, 0, 1, 1], [], []>} : vector<8x4xf32>, vector<4x128xf32>, vector<8x128xf32> -> vector<8x128xf32>
    %c127_i32_38 = arith.constant 127 : i32
    %48 = tpu.dynamic_rotate %44 by %c127_i32_38 dim 1 : vector<4x128xf32>, i32 -> vector<4x128xf32>
    %c127_i32_39 = arith.constant 127 : i32
    %49 = vector.broadcast %c127_i32_39 : i32 to vector<4x128xi32>
    %50 = arith.cmpi eq, %0, %49 : vector<4x128xi32>
    %c1_40 = arith.constant 1 : index
    %c0_41 = arith.constant 0 : index
    %c0_42 = arith.constant 0 : index
    %c0_43 = arith.constant 0 : index
    %51 = vector.load %arg3[%c1_40, %c0_41, %c0_42, %c0_43] : memref<2x2x4x1xf32, #tpu.memory_space<vmem>>, vector<1x1x4x1xf32>
    %52 = vector.shape_cast %51 : vector<1x1x4x1xf32> to vector<4x1xf32>
    %53 = vector.shape_cast %52 : vector<4x1xf32> to vector<4x1xf32>
    %54 = vector.broadcast %53 : vector<4x1xf32> to vector<4x128xf32>
    %55 = arith.select %50, %54, %48 : vector<4x128xi1>, vector<4x128xf32>
    %c1_44 = arith.constant 1 : index
    %c0_45 = arith.constant 0 : index
    %c0_46 = arith.constant 0 : index
    %56 = vector.load %arg4[%c1_44, %c0_45, %c0_46] : memref<3x8x4xf32, #tpu.memory_space<vmem>>, vector<1x8x4xf32>
    %57 = vector.shape_cast %56 : vector<1x8x4xf32> to vector<8x4xf32>
    %cst_47 = arith.constant dense<0.000000e+00> : vector<8x128xf32>
    %58 = tpu.matmul %57, %55, %cst_47 {dimension_numbers = #tpu.dot_dimension_numbers<[1], [0], [0], [1], [0, 0, 1, 1], [], []>} : vector<8x4xf32>, vector<4x128xf32>, vector<8x128xf32> -> vector<8x128xf32>
    %59 = arith.addf %47, %58 : vector<8x128xf32>
    %c126_i32_48 = arith.constant 126 : i32
    %60 = tpu.dynamic_rotate %44 by %c126_i32_48 dim 1 : vector<4x128xf32>, i32 -> vector<4x128xf32>
    %c126_i32_49 = arith.constant 126 : i32
    %61 = vector.broadcast %c126_i32_49 : i32 to vector<4x128xi32>
    %62 = arith.cmpi eq, %0, %61 : vector<4x128xi32>
    %c1_50 = arith.constant 1 : index
    %c0_51 = arith.constant 0 : index
    %c0_52 = arith.constant 0 : index
    %c0_53 = arith.constant 0 : index
    %63 = vector.load %arg3[%c1_50, %c0_51, %c0_52, %c0_53] : memref<2x2x4x1xf32, #tpu.memory_space<vmem>>, vector<1x1x4x1xf32>
    %64 = vector.shape_cast %63 : vector<1x1x4x1xf32> to vector<4x1xf32>
    %65 = vector.shape_cast %64 : vector<4x1xf32> to vector<4x1xf32>
    %66 = vector.broadcast %65 : vector<4x1xf32> to vector<4x128xf32>
    %67 = arith.select %62, %66, %60 : vector<4x128xi1>, vector<4x128xf32>
    %c127_i32_54 = arith.constant 127 : i32
    %68 = vector.broadcast %c127_i32_54 : i32 to vector<4x128xi32>
    %69 = arith.cmpi eq, %0, %68 : vector<4x128xi32>
    %c1_55 = arith.constant 1 : index
    %c1_56 = arith.constant 1 : index
    %c0_57 = arith.constant 0 : index
    %c0_58 = arith.constant 0 : index
    %70 = vector.load %arg3[%c1_55, %c1_56, %c0_57, %c0_58] : memref<2x2x4x1xf32, #tpu.memory_space<vmem>>, vector<1x1x4x1xf32>
    %71 = vector.shape_cast %70 : vector<1x1x4x1xf32> to vector<4x1xf32>
    %72 = vector.shape_cast %71 : vector<4x1xf32> to vector<4x1xf32>
    %73 = vector.broadcast %72 : vector<4x1xf32> to vector<4x128xf32>
    %74 = arith.select %69, %73, %67 : vector<4x128xi1>, vector<4x128xf32>
    %c2_59 = arith.constant 2 : index
    %c0_60 = arith.constant 0 : index
    %c0_61 = arith.constant 0 : index
    %75 = vector.load %arg4[%c2_59, %c0_60, %c0_61] : memref<3x8x4xf32, #tpu.memory_space<vmem>>, vector<1x8x4xf32>
    %76 = vector.shape_cast %75 : vector<1x8x4xf32> to vector<8x4xf32>
    %cst_62 = arith.constant dense<0.000000e+00> : vector<8x128xf32>
    %77 = tpu.matmul %76, %74, %cst_62 {dimension_numbers = #tpu.dot_dimension_numbers<[1], [0], [0], [1], [0, 0, 1, 1], [], []>} : vector<8x4xf32>, vector<4x128xf32>, vector<8x128xf32> -> vector<8x128xf32>
    %78 = arith.addf %59, %77 : vector<8x128xf32>
    %79 = vector.broadcast %1 : vector<8x1xf32> to vector<8x128xf32>
    %80 = arith.addf %78, %79 : vector<8x128xf32>
    %c1_63 = arith.constant 1 : index
    %c0_64 = arith.constant 0 : index
    %c0_65 = arith.constant 0 : index
    %81 = vector.load %arg6[%c1_63, %c0_64, %c0_65] : memref<2x8x128xf32, #tpu.memory_space<vmem>>, vector<1x8x128xf32>
    %82 = vector.shape_cast %81 : vector<1x8x128xf32> to vector<8x128xf32>
    %83 = vector.shape_cast %80 : vector<8x128xf32> to vector<1x8x128xf32>
    tpu.vector_store %arg6[%c1_63, %c0_64, %c0_65], %83 {strides = array<i32>} : memref<2x8x128xf32, #tpu.memory_space<vmem>>, vector<1x8x128xf32>,
    return
  }
  func.func @transform_0(%arg0: i32, %arg1: i32) -> (i32, i32, i32) {
    %c0_i32 = arith.constant 0 : i32
    %c0_i32_0 = arith.constant 0 : i32
    return %arg1, %c0_i32, %arg0 : i32, i32, i32
  }
  func.func @transform_1(%arg0: i32, %arg1: i32) -> (i32, i32, i32, i32) {
    %c0_i32 = arith.constant 0 : i32
    %c0_i32_0 = arith.constant 0 : i32
    %c0_i32_1 = arith.constant 0 : i32
    return %arg1, %arg0, %c0_i32, %c0_i32_0 : i32, i32, i32, i32
  }
  func.func @transform_2(%arg0: i32, %arg1: i32) -> (i32, i32, i32) {
    %c0_i32 = arith.constant 0 : i32
    %c0_i32_0 = arith.constant 0 : i32
    %c0_i32_1 = arith.constant 0 : i32
    %c0_i32_2 = arith.constant 0 : i32
    return %c0_i32, %c0_i32_0, %c0_i32_1 : i32, i32, i32
  }
  func.func @transform_3(%arg0: i32, %arg1: i32) -> (i32, i32) {
    %c0_i32 = arith.constant 0 : i32
    %c0_i32_0 = arith.constant 0 : i32
    %c0_i32_1 = arith.constant 0 : i32
    return %c0_i32, %c0_i32_0 : i32, i32
  }
  func.func @transform_4(%arg0: i32, %arg1: i32) -> (i32, i32, i32) {
    %c0_i32 = arith.constant 0 : i32
    %c0_i32_0 = arith.constant 0 : i32
    return %arg1, %c0_i32, %arg0 : i32, i32, i32
  }
}

</mosaic_0001>

<llo_original>
// kernel: tpu_custom_call.1
$region0: #{tpu_custom_call.1}
  #allocation0 [shape = 'u32[]', space=smem, size = 0x4, offset = 0x4, fixed_abs, tag = 'smem constant byte address 0x4 - core index']
  #allocation1 [shape = 'u32[144,128]{1,0:T(1,128)}', space=vmem, size = 0x12000, scoped, tag = 'internal scratch']
  %s0 = inlined_call_operand.vmem [shape: f32[2,4,130], index: 0, kind: input, shape index: {}]
  %s1 = inlined_call_operand.vmem [shape: f32[2,2,4,1], index: 1, kind: input, shape index: {}]
  %s2 = inlined_call_operand.vmem [shape: f32[3,8,4], index: 2, kind: input, shape index: {}]
  %s3 = inlined_call_operand.vmem [shape: f32[8,1], index: 3, kind: input, shape index: {}]
  %s4 = inlined_call_operand.hbm [shape: f32[2,8,128], index: 4, kind: output, shape index: {}]
  %s5 = sld [smem:[#allocation0]]
  $region67: #{tpu_custom_call.1} parent=0
    _
  %s7 = ssub.s32 1, %s5
  %s8 = scalar_select 0, %s7, %s5
  $region1: #{tpu_custom_call.1} parent=0
    #allocation2 [shape = 'u8[4096]{0}', space=vmem, size = 0x1000, scoped, tag = 'input window, operand 0, single buffered']
    #allocation3 [shape = 'u8[8192]{0}', space=vmem, size = 0x2000, scoped, tag = 'output window, operand 0, single buffered']
    #allocation4 [shape = 's32[1]{0}', space=sflag, size = 0x4, scoped, tag = 'scoped memory for tpu_custom_call.1']
    %9 = vsyncpa [#allocation4], 0
    // Predicated region
    $region2: #{tpu_custom_call.1} parent=1 // pred_check
      _
    $region3: #{tpu_custom_call.1} parent=1 // pred_check_branch
      %11 = sbr.rel (0) target = $region5
    $region4: #{tpu_custom_call.1} parent=1 // pred_region
      // Predicated region
      $region6: #{tpu_custom_call.1} parent=4 // pred_check
        _
      $region7: #{tpu_custom_call.1} parent=4 // pred_check_branch
        %13 = sbr.rel (0) target = $region9
      $region8: #{tpu_custom_call.1} parent=4 // pred_region
        // Predicated region
        $region10: #{tpu_custom_call.1} parent=8 // pred_check
          _
        $region11: #{tpu_custom_call.1} parent=8 // pred_check_branch
          %15 = sbr.rel target = $region13
        $region12: #{tpu_custom_call.1} parent=8 // pred_region
          // Predicated region
          $region25: #{tpu_custom_call.1} parent=12 // pred_check
            _
          $region26: #{tpu_custom_call.1} parent=12 // pred_check_branch
            %32 = sbr.rel (0) target = $region28
          $region27: #{tpu_custom_call.1} parent=12 // pred_region
            loop: start=0, step=1, limit=1
            $region29: #{tpu_custom_call.1} parent=27 // loop_pre_header
              _
            $region30: #{tpu_custom_call.1} parent=27 // loop_header
              %s34 = sphi 0, %s38
              %p35 = scmp.ge.s32.totalorder %s34, 1
              %s39 = sphi %s0, %s0
              %s40 = sphi [#allocation2], [#allocation2]
            $region31: #{tpu_custom_call.1} parent=27 // loop_header_branch
              %37 = sbr.rel (%p35) target = $region35
            $region32: #{tpu_custom_call.1} parent=27 // loop_body
              _
            $region33: #{tpu_custom_call.1} parent=27 // loop_footer
              %s38 = sadd.s32 1, %s34
            $region34: #{tpu_custom_call.1} parent=27 // loop_footer_branch
              %33 = sbr.rel target = $region30
            $region35: #{tpu_custom_call.1} parent=27 // loop_exit
              _
            loop: start=0, step=1, limit=1
            $region36: #{tpu_custom_call.1} parent=27 // loop_pre_header
              _
            $region37: #{tpu_custom_call.1} parent=27 // loop_header
              %s43 = sphi 0, %s47
              %p44 = scmp.ge.s32.totalorder %s43, 1
              %s48 = sphi %s0, %s0
              %s49 = sphi [#allocation2], [#allocation2]
            $region38: #{tpu_custom_call.1} parent=27 // loop_header_branch
              %46 = sbr.rel (%p44) target = $region42
            $region39: #{tpu_custom_call.1} parent=27 // loop_body
              %v50 = vld [vmem:[%s48] sm:$0xf]
              %51 = vst [vmem:[%s49] sm:$0xf] %v50
              %v52 = vld [vmem:[%s48 + $0x8] sm:$0xf]
              %53 = vst [vmem:[%s49 + $0x4] sm:$0xf] %v52
            $region40: #{tpu_custom_call.1} parent=27 // loop_footer
              %s47 = sadd.s32 1, %s43
            $region41: #{tpu_custom_call.1} parent=27 // loop_footer_branch
              %42 = sbr.rel target = $region37
            $region42: #{tpu_custom_call.1} parent=27 // loop_exit
              _
          $region28: #{tpu_custom_call.1} parent=12 // pred_fallthru
            _
        $region13: #{tpu_custom_call.1} parent=8 // pred_fallthru
          _
        // Predicated region
        $region14: #{tpu_custom_call.1} parent=8 // pred_check
          _
        $region15: #{tpu_custom_call.1} parent=8 // pred_check_branch
          %17 = sbr.rel (0) target = $region17
        $region16: #{tpu_custom_call.1} parent=8 // pred_region
          loop: start=0, step=1, limit=1
          $region18: #{tpu_custom_call.1} parent=16 // loop_pre_header
            _
          $region19: #{tpu_custom_call.1} parent=16 // loop_header
            %s20 = sphi 0, %s24
            %p21 = scmp.ge.s32.totalorder %s20, 1
            %s25 = sphi %s0, %s0
            %s26 = sphi [#allocation2], [#allocation2]
          $region20: #{tpu_custom_call.1} parent=16 // loop_header_branch
            %23 = sbr.rel (%p21) target = $region24
          $region21: #{tpu_custom_call.1} parent=16 // loop_body
            %v27 = vld [vmem:[%s25] sm:$0xf]
            %28 = vst [vmem:[%s26] sm:$0xf] %v27
            %v29 = vld [vmem:[%s25 + $0x8] sm:$0xf]
            %30 = vst [vmem:[%s26 + $0x4] sm:$0xf] %v29
          $region22: #{tpu_custom_call.1} parent=16 // loop_footer
            %s24 = sadd.s32 1, %s20
          $region23: #{tpu_custom_call.1} parent=16 // loop_footer_branch
            %19 = sbr.rel target = $region19
          $region24: #{tpu_custom_call.1} parent=16 // loop_exit
            _
        $region17: #{tpu_custom_call.1} parent=8 // pred_fallthru
          _
      $region9: #{tpu_custom_call.1} parent=4 // pred_fallthru
        _
      %54 = vnop
    $region5: #{tpu_custom_call.1} parent=1 // pred_fallthru
      _
    // Predicated region
    $region43: #{tpu_custom_call.1} parent=1 // pred_check
      _
    $region44: #{tpu_custom_call.1} parent=1 // pred_check_branch
      %56 = sbr.rel (0) target = $region46
    $region45: #{tpu_custom_call.1} parent=1 // pred_region
      _
    $region46: #{tpu_custom_call.1} parent=1 // pred_fallthru
      _
    // Predicated region
    $region47: #{tpu_custom_call.1} parent=1 // pred_check
      _
    $region48: #{tpu_custom_call.1} parent=1 // pred_check_branch
      %58 = sbr.rel (0) target = $region50
    $region49: #{tpu_custom_call.1} parent=1 // pred_region
      _
    $region50: #{tpu_custom_call.1} parent=1 // pred_fallthru
      _
    // Predicated region
    $region51: #{tpu_custom_call.1} parent=1 // pred_check
      _
    $region52: #{tpu_custom_call.1} parent=1 // pred_check_branch
      %60 = sbr.rel (0) target = $region54
    $region53: #{tpu_custom_call.1} parent=1 // pred_region
      _
    $region54: #{tpu_custom_call.1} parent=1 // pred_fallthru
      _
    // Predicated region
    $region55: #{tpu_custom_call.1} parent=1 // pred_check
      _
    $region56: #{tpu_custom_call.1} parent=1 // pred_check_branch
      %62 = sbr.rel (0) target = $region58
    $region57: #{tpu_custom_call.1} parent=1 // pred_region
      _
    $region58: #{tpu_custom_call.1} parent=1 // pred_fallthru
      _
    %v63 = vlaneseq
    %v64 = vand.u32 %v63, 127
    %v65 = vld [vmem:[%s3] sm:$0xff]
    %v66 = vld [vmem:[#allocation2] sm:$0xf]
    %v67 = vld [vmem:[%s2] sm:$0xff]
    %68 = vrot.lane.b32.xlu0 %v66, 127
    %v69 = vpop.permute.xlu0 %68
    %vm70 = vcmp.eq.s32.totalorder %v64, 127
    %v71 = vld [vmem:[%s1] sm:$0xf]
    %73 = vset.pattern.permute.xlu0 0
    %74 = vperm.xlu0 %73, %v71
    %v75 = vpop.permute.xlu0 %74
    %v77 = vsel %vm70, %v75, %v69
    %s78 = scalar_lea.vmem %s2, 8
    %v79 = vld [vmem:[%s78] sm:$0xff]
    %vm80 = vcmask 31744
    %v82 = vsel %vm80, %v79, 0
    %vm84 = vcmask 1043456
    %v86 = vsel %vm84, %v77, 0
    %88 = vmatprep.subr.mxu0 0.0
    %89 = vmatpush1.msra.mxu0 %v86
    %90 = vmatprep.subr.mxu0 0.0
    %91 = vmatpush1.msra.mxu0 0.0
    %92 = vmatprep.subr.mxu0 0.0
    %93 = vmatpush1.msra.mxu0 0.0
    %94 = vmatprep.subr.mxu0 0.0
    %95 = vmatpush1.msra.mxu0 0.0
    %96 = vmatprep.subr.mxu0 0.0
    %97 = vmatpush1.msra.mxu0 0.0
    %98 = vmatprep.subr.mxu0 0.0
    %99 = vmatpush1.msra.mxu0 0.0
    %100 = vmatprep.subr.mxu0 0.0
    %101 = vmatpush1.msra.mxu0 0.0
    %102 = vmatprep.subr.mxu0 0.0
    %103 = vmatpush1.msra.mxu0 0.0
    %104 = vmatprep.subr.mxu0 0.0
    %105 = vmatpush1.msra.mxu0 0.0
    %106 = vmatprep.subr.mxu0 0.0
    %107 = vmatpush1.msra.mxu0 0.0
    %108 = vmatprep.subr.mxu0 0.0
    %109 = vmatpush1.msra.mxu0 0.0
    %110 = vmatprep.subr.mxu0 0.0
    %111 = vmatpush1.msra.mxu0 0.0
    %112 = vmatprep.subr.mxu0 0.0
    %113 = vmatpush1.msra.mxu0 0.0
    %114 = vmatprep.subr.mxu0 0.0
    %115 = vmatpush1.msra.mxu0 0.0
    %116 = vmatprep.subr.mxu0 0.0
    %117 = vmatpush1.msra.mxu0 0.0
    %118 = vmatprep.subr.mxu0 0.0
    %119 = vmatpush1.msra.mxu0 0.0
    %120 = vmatprep.subr.mxu0 0.0
    %121 = vmatpush1.msra.mxu0 0.0
    %122 = vmatprep.subr.mxu0 0.0
    %123 = vmatpush1.msra.mxu0 0.0
    %124 = vmatprep.subr.mxu0 0.0
    %125 = vmatpush1.msra.mxu0 0.0
    %126 = vmatprep.subr.mxu0 0.0
    %127 = vmatpush1.msra.mxu0 0.0
    %128 = vmatprep.subr.mxu0 0.0
    %129 = vmatpush1.msra.mxu0 0.0
    %130 = vmatprep.subr.mxu0 0.0
    %131 = vmatpush1.msra.mxu0 0.0
    %132 = vmatprep.subr.mxu0 0.0
    %133 = vmatpush1.msra.mxu0 0.0
    %134 = vmatprep.subr.mxu0 0.0
    %135 = vmatpush1.msra.mxu0 0.0
    %136 = vmatprep.subr.mxu0 0.0
    %137 = vmatpush1.msra.mxu0 0.0
    %138 = vmatprep.subr.mxu0 0.0
    %139 = vmatpush1.msra.mxu0 0.0
    %140 = vmatprep.subr.mxu0 0.0
    %141 = vmatpush1.msra.mxu0 0.0
    %142 = vmatprep.subr.mxu0 0.0
    %143 = vmatpush1.msra.mxu0 0.0
    %144 = vmatprep.subr.mxu0 0.0
    %145 = vmatpush1.msra.mxu0 0.0
    %146 = vmatprep.subr.mxu0 0.0
    %147 = vmatpush1.msra.mxu0 0.0
    %148 = vmatprep.subr.mxu0 0.0
    %149 = vmatpush1.msra.mxu0 0.0
    %150 = vmatprep.subr.mxu0 0.0
    %151 = vmatpush1.msra.mxu0 0.0
    %152 = vmatprep.mubr.f32.mxu0 0.0
    %153 = vmatmul.mubr.f32.gmra.mrb[0].mxu0 %v82
    %v154 = vpop.f32.mrb[0].mxu0
    %v155 = vadd.f32 0.0, %v154
    %v156 = vpop.f32.mrb[0].mxu0
    %157 = vdwg.mxu0
    %v159 = vsel %vm80, %v67, 0
    %v162 = vsel %vm84, %v66, 0
    %164 = vmatprep.subr.mxu0 0.0
    %165 = vmatpush1.msra.mxu0 %v162
    %166 = vmatprep.subr.mxu0 0.0
    %167 = vmatpush1.msra.mxu0 0.0
    %168 = vmatprep.subr.mxu0 0.0
    %169 = vmatpush1.msra.mxu0 0.0
    %170 = vmatprep.subr.mxu0 0.0
    %171 = vmatpush1.msra.mxu0 0.0
    %172 = vmatprep.subr.mxu0 0.0
    %173 = vmatpush1.msra.mxu0 0.0
    %174 = vmatprep.subr.mxu0 0.0
    %175 = vmatpush1.msra.mxu0 0.0
    %176 = vmatprep.subr.mxu0 0.0
    %177 = vmatpush1.msra.mxu0 0.0
    %178 = vmatprep.subr.mxu0 0.0
    %179 = vmatpush1.msra.mxu0 0.0
    %180 = vmatprep.subr.mxu0 0.0
    %181 = vmatpush1.msra.mxu0 0.0
    %182 = vmatprep.subr.mxu0 0.0
    %183 = vmatpush1.msra.mxu0 0.0
    %184 = vmatprep.subr.mxu0 0.0
    %185 = vmatpush1.msra.mxu0 0.0
    %186 = vmatprep.subr.mxu0 0.0
    %187 = vmatpush1.msra.mxu0 0.0
    %188 = vmatprep.subr.mxu0 0.0
    %189 = vmatpush1.msra.mxu0 0.0
    %190 = vmatprep.subr.mxu0 0.0
    %191 = vmatpush1.msra.mxu0 0.0
    %192 = vmatprep.subr.mxu0 0.0
    %193 = vmatpush1.msra.mxu0 0.0
    %194 = vmatprep.subr.mxu0 0.0
    %195 = vmatpush1.msra.mxu0 0.0
    %196 = vmatprep.subr.mxu0 0.0
    %197 = vmatpush1.msra.mxu0 0.0
    %198 = vmatprep.subr.mxu0 0.0
    %199 = vmatpush1.msra.mxu0 0.0
    %200 = vmatprep.subr.mxu0 0.0
    %201 = vmatpush1.msra.mxu0 0.0
    %202 = vmatprep.subr.mxu0 0.0
    %203 = vmatpush1.msra.mxu0 0.0
    %204 = vmatprep.subr.mxu0 0.0
    %205 = vmatpush1.msra.mxu0 0.0
    %206 = vmatprep.subr.mxu0 0.0
    %207 = vmatpush1.msra.mxu0 0.0
    %208 = vmatprep.subr.mxu0 0.0
    %209 = vmatpush1.msra.mxu0 0.0
    %210 = vmatprep.subr.mxu0 0.0
    %211 = vmatpush1.msra.mxu0 0.0
    %212 = vmatprep.subr.mxu0 0.0
    %213 = vmatpush1.msra.mxu0 0.0
    %214 = vmatprep.subr.mxu0 0.0
    %215 = vmatpush1.msra.mxu0 0.0
    %216 = vmatprep.subr.mxu0 0.0
    %217 = vmatpush1.msra.mxu0 0.0
    %218 = vmatprep.subr.mxu0 0.0
    %219 = vmatpush1.msra.mxu0 0.0
    %220 = vmatprep.subr.mxu0 0.0
    %221 = vmatpush1.msra.mxu0 0.0
    %222 = vmatprep.subr.mxu0 0.0
    %223 = vmatpush1.msra.mxu0 0.0
    %224 = vmatprep.subr.mxu0 0.0
    %225 = vmatpush1.msra.mxu0 0.0
    %226 = vmatprep.subr.mxu0 0.0
    %227 = vmatpush1.msra.mxu0 0.0
    %228 = vmatprep.mubr.f32.mxu0 0.0
    %229 = vmatmul.mubr.f32.gmra.mrb[0].mxu0 %v159
    %v230 = vpop.f32.mrb[0].mxu0
    %v231 = vadd.f32 %v155, %v230
    %v232 = vpop.f32.mrb[0].mxu0
    %233 = vdwg.mxu0
    %234 = vrot.lane.b32.xlu0 %v66, 126
    %v235 = vpop.permute.xlu0 %234
    %vm236 = vcmp.eq.s32.totalorder %v64, 126
    %v237 = vsel %vm236, %v75, %v235
    %s238 = scalar_lea.vmem %s1, 4
    %v239 = vld [vmem:[%s238] sm:$0xf]
    %241 = vset.pattern.permute.xlu0 0
    %242 = vperm.xlu0 %241, %v239
    %v243 = vpop.permute.xlu0 %242
    %v245 = vsel %vm70, %v243, %v237
    %s246 = scalar_lea.vmem %s2, 16
    %v247 = vld [vmem:[%s246] sm:$0xff]
    %v249 = vsel %vm80, %v247, 0
    %v252 = vsel %vm84, %v245, 0
    %254 = vmatprep.subr.mxu0 0.0
    %255 = vmatpush1.msra.mxu0 %v252
    %256 = vmatprep.subr.mxu0 0.0
    %257 = vmatpush1.msra.mxu0 0.0
    %258 = vmatprep.subr.mxu0 0.0
    %259 = vmatpush1.msra.mxu0 0.0
    %260 = vmatprep.subr.mxu0 0.0
    %261 = vmatpush1.msra.mxu0 0.0
    %262 = vmatprep.subr.mxu0 0.0
    %263 = vmatpush1.msra.mxu0 0.0
    %264 = vmatprep.subr.mxu0 0.0
    %265 = vmatpush1.msra.mxu0 0.0
    %266 = vmatprep.subr.mxu0 0.0
    %267 = vmatpush1.msra.mxu0 0.0
    %268 = vmatprep.subr.mxu0 0.0
    %269 = vmatpush1.msra.mxu0 0.0
    %270 = vmatprep.subr.mxu0 0.0
    %271 = vmatpush1.msra.mxu0 0.0
    %272 = vmatprep.subr.mxu0 0.0
    %273 = vmatpush1.msra.mxu0 0.0
    %274 = vmatprep.subr.mxu0 0.0
    %275 = vmatpush1.msra.mxu0 0.0
    %276 = vmatprep.subr.mxu0 0.0
    %277 = vmatpush1.msra.mxu0 0.0
    %278 = vmatprep.subr.mxu0 0.0
    %279 = vmatpush1.msra.mxu0 0.0
    %280 = vmatprep.subr.mxu0 0.0
    %281 = vmatpush1.msra.mxu0 0.0
    %282 = vmatprep.subr.mxu0 0.0
    %283 = vmatpush1.msra.mxu0 0.0
    %284 = vmatprep.subr.mxu0 0.0
    %285 = vmatpush1.msra.mxu0 0.0
    %286 = vmatprep.subr.mxu0 0.0
    %287 = vmatpush1.msra.mxu0 0.0
    %288 = vmatprep.subr.mxu0 0.0
    %289 = vmatpush1.msra.mxu0 0.0
    %290 = vmatprep.subr.mxu0 0.0
    %291 = vmatpush1.msra.mxu0 0.0
    %292 = vmatprep.subr.mxu0 0.0
    %293 = vmatpush1.msra.mxu0 0.0
    %294 = vmatprep.subr.mxu0 0.0
    %295 = vmatpush1.msra.mxu0 0.0
    %296 = vmatprep.subr.mxu0 0.0
    %297 = vmatpush1.msra.mxu0 0.0
    %298 = vmatprep.subr.mxu0 0.0
    %299 = vmatpush1.msra.mxu0 0.0
    %300 = vmatprep.subr.mxu0 0.0
    %301 = vmatpush1.msra.mxu0 0.0
    %302 = vmatprep.subr.mxu0 0.0
    %303 = vmatpush1.msra.mxu0 0.0
    %304 = vmatprep.subr.mxu0 0.0
    %305 = vmatpush1.msra.mxu0 0.0
    %306 = vmatprep.subr.mxu0 0.0
    %307 = vmatpush1.msra.mxu0 0.0
    %308 = vmatprep.subr.mxu0 0.0
    %309 = vmatpush1.msra.mxu0 0.0
    %310 = vmatprep.subr.mxu0 0.0
    %311 = vmatpush1.msra.mxu0 0.0
    %312 = vmatprep.subr.mxu0 0.0
    %313 = vmatpush1.msra.mxu0 0.0
    %314 = vmatprep.subr.mxu0 0.0
    %315 = vmatpush1.msra.mxu0 0.0
    %316 = vmatprep.subr.mxu0 0.0
    %317 = vmatpush1.msra.mxu0 0.0
    %318 = vmatprep.mubr.f32.mxu0 0.0
    %319 = vmatmul.mubr.f32.gmra.mrb[0].mxu0 %v249
    %v320 = vpop.f32.mrb[0].mxu0
    %v321 = vadd.f32 0.0, %v320
    %v322 = vpop.f32.mrb[0].mxu0
    %323 = vdwg.mxu0
    %v324 = vadd.f32 %v231, %v321
    %326 = vset.pattern.permute.xlu0 0
    %327 = vperm.xlu0 %326, %v65
    %v328 = vpop.permute.xlu0 %327
    %v330 = vadd.f32 %v324, %v328
    %331 = vst [vmem:[#allocation3] sm:$0xff] %v330
    %s332 = scalar_lea.vmem [#allocation2], 4
    %v333 = vld [vmem:[%s332] sm:$0xf]
    %v334 = vld [vmem:[%s2] sm:$0xff]
    %335 = vrot.lane.b32.xlu0 %v333, 127
    %v336 = vpop.permute.xlu0 %335
    %s337 = scalar_lea.vmem %s1, 8
    %v338 = vld [vmem:[%s337] sm:$0xf]
    %340 = vset.pattern.permute.xlu0 0
    %341 = vperm.xlu0 %340, %v338
    %v342 = vpop.permute.xlu0 %341
    %v344 = vsel %vm70, %v342, %v336
    %v345 = vld [vmem:[%s78] sm:$0xff]
    %v347 = vsel %vm80, %v345, 0
    %v350 = vsel %vm84, %v344, 0
    %352 = vmatprep.subr.mxu0 0.0
    %353 = vmatpush1.msra.mxu0 %v350
    %354 = vmatprep.subr.mxu0 0.0
    %355 = vmatpush1.msra.mxu0 0.0
    %356 = vmatprep.subr.mxu0 0.0
    %357 = vmatpush1.msra.mxu0 0.0
    %358 = vmatprep.subr.mxu0 0.0
    %359 = vmatpush1.msra.mxu0 0.0
    %360 = vmatprep.subr.mxu0 0.0
    %361 = vmatpush1.msra.mxu0 0.0
    %362 = vmatprep.subr.mxu0 0.0
    %363 = vmatpush1.msra.mxu0 0.0
    %364 = vmatprep.subr.mxu0 0.0
    %365 = vmatpush1.msra.mxu0 0.0
    %366 = vmatprep.subr.mxu0 0.0
    %367 = vmatpush1.msra.mxu0 0.0
    %368 = vmatprep.subr.mxu0 0.0
    %369 = vmatpush1.msra.mxu0 0.0
    %370 = vmatprep.subr.mxu0 0.0
    %371 = vmatpush1.msra.mxu0 0.0
    %372 = vmatprep.subr.mxu0 0.0
    %373 = vmatpush1.msra.mxu0 0.0
    %374 = vmatprep.subr.mxu0 0.0
    %375 = vmatpush1.msra.mxu0 0.0
    %376 = vmatprep.subr.mxu0 0.0
    %377 = vmatpush1.msra.mxu0 0.0
    %378 = vmatprep.subr.mxu0 0.0
    %379 = vmatpush1.msra.mxu0 0.0
    %380 = vmatprep.subr.mxu0 0.0
    %381 = vmatpush1.msra.mxu0 0.0
    %382 = vmatprep.subr.mxu0 0.0
    %383 = vmatpush1.msra.mxu0 0.0
    %384 = vmatprep.subr.mxu0 0.0
    %385 = vmatpush1.msra.mxu0 0.0
    %386 = vmatprep.subr.mxu0 0.0
    %387 = vmatpush1.msra.mxu0 0.0
    %388 = vmatprep.subr.mxu0 0.0
    %389 = vmatpush1.msra.mxu0 0.0
    %390 = vmatprep.subr.mxu0 0.0
    %391 = vmatpush1.msra.mxu0 0.0
    %392 = vmatprep.subr.mxu0 0.0
    %393 = vmatpush1.msra.mxu0 0.0
    %394 = vmatprep.subr.mxu0 0.0
    %395 = vmatpush1.msra.mxu0 0.0
    %396 = vmatprep.subr.mxu0 0.0
    %397 = vmatpush1.msra.mxu0 0.0
    %398 = vmatprep.subr.mxu0 0.0
    %399 = vmatpush1.msra.mxu0 0.0
    %400 = vmatprep.subr.mxu0 0.0
    %401 = vmatpush1.msra.mxu0 0.0
    %402 = vmatprep.subr.mxu0 0.0
    %403 = vmatpush1.msra.mxu0 0.0
    %404 = vmatprep.subr.mxu0 0.0
    %405 = vmatpush1.msra.mxu0 0.0
    %406 = vmatprep.subr.mxu0 0.0
    %407 = vmatpush1.msra.mxu0 0.0
    %408 = vmatprep.subr.mxu0 0.0
    %409 = vmatpush1.msra.mxu0 0.0
    %410 = vmatprep.subr.mxu0 0.0
    %411 = vmatpush1.msra.mxu0 0.0
    %412 = vmatprep.subr.mxu0 0.0
    %413 = vmatpush1.msra.mxu0 0.0
    %414 = vmatprep.subr.mxu0 0.0
    %415 = vmatpush1.msra.mxu0 0.0
    %416 = vmatprep.mubr.f32.mxu0 0.0
    %417 = vmatmul.mubr.f32.gmra.mrb[0].mxu0 %v347
    %v418 = vpop.f32.mrb[0].mxu0
    %v419 = vadd.f32 0.0, %v418
    %v420 = vpop.f32.mrb[0].mxu0
    %421 = vdwg.mxu0
    %v423 = vsel %vm80, %v334, 0
    %v426 = vsel %vm84, %v333, 0
    %428 = vmatprep.subr.mxu0 0.0
    %429 = vmatpush1.msra.mxu0 %v426
    %430 = vmatprep.subr.mxu0 0.0
    %431 = vmatpush1.msra.mxu0 0.0
    %432 = vmatprep.subr.mxu0 0.0
    %433 = vmatpush1.msra.mxu0 0.0
    %434 = vmatprep.subr.mxu0 0.0
    %435 = vmatpush1.msra.mxu0 0.0
    %436 = vmatprep.subr.mxu0 0.0
    %437 = vmatpush1.msra.mxu0 0.0
    %438 = vmatprep.subr.mxu0 0.0
    %439 = vmatpush1.msra.mxu0 0.0
    %440 = vmatprep.subr.mxu0 0.0
    %441 = vmatpush1.msra.mxu0 0.0
    %442 = vmatprep.subr.mxu0 0.0
    %443 = vmatpush1.msra.mxu0 0.0
    %444 = vmatprep.subr.mxu0 0.0
    %445 = vmatpush1.msra.mxu0 0.0
    %446 = vmatprep.subr.mxu0 0.0
    %447 = vmatpush1.msra.mxu0 0.0
    %448 = vmatprep.subr.mxu0 0.0
    %449 = vmatpush1.msra.mxu0 0.0
    %450 = vmatprep.subr.mxu0 0.0
    %451 = vmatpush1.msra.mxu0 0.0
    %452 = vmatprep.subr.mxu0 0.0
    %453 = vmatpush1.msra.mxu0 0.0
    %454 = vmatprep.subr.mxu0 0.0
    %455 = vmatpush1.msra.mxu0 0.0
    %456 = vmatprep.subr.mxu0 0.0
    %457 = vmatpush1.msra.mxu0 0.0
    %458 = vmatprep.subr.mxu0 0.0
    %459 = vmatpush1.msra.mxu0 0.0
    %460 = vmatprep.subr.mxu0 0.0
    %461 = vmatpush1.msra.mxu0 0.0
    %462 = vmatprep.subr.mxu0 0.0
    %463 = vmatpush1.msra.mxu0 0.0
    %464 = vmatprep.subr.mxu0 0.0
    %465 = vmatpush1.msra.mxu0 0.0
    %466 = vmatprep.subr.mxu0 0.0
    %467 = vmatpush1.msra.mxu0 0.0
    %468 = vmatprep.subr.mxu0 0.0
    %469 = vmatpush1.msra.mxu0 0.0
    %470 = vmatprep.subr.mxu0 0.0
    %471 = vmatpush1.msra.mxu0 0.0
    %472 = vmatprep.subr.mxu0 0.0
    %473 = vmatpush1.msra.mxu0 0.0
    %474 = vmatprep.subr.mxu0 0.0
    %475 = vmatpush1.msra.mxu0 0.0
    %476 = vmatprep.subr.mxu0 0.0
    %477 = vmatpush1.msra.mxu0 0.0
    %478 = vmatprep.subr.mxu0 0.0
    %479 = vmatpush1.msra.mxu0 0.0
    %480 = vmatprep.subr.mxu0 0.0
    %481 = vmatpush1.msra.mxu0 0.0
    %482 = vmatprep.subr.mxu0 0.0
    %483 = vmatpush1.msra.mxu0 0.0
    %484 = vmatprep.subr.mxu0 0.0
    %485 = vmatpush1.msra.mxu0 0.0
    %486 = vmatprep.subr.mxu0 0.0
    %487 = vmatpush1.msra.mxu0 0.0
    %488 = vmatprep.subr.mxu0 0.0
    %489 = vmatpush1.msra.mxu0 0.0
    %490 = vmatprep.subr.mxu0 0.0
    %491 = vmatpush1.msra.mxu0 0.0
    %492 = vmatprep.mubr.f32.mxu0 0.0
    %493 = vmatmul.mubr.f32.gmra.mrb[0].mxu0 %v423
    %v494 = vpop.f32.mrb[0].mxu0
    %v495 = vadd.f32 %v419, %v494
    %v496 = vpop.f32.mrb[0].mxu0
    %497 = vdwg.mxu0
    %498 = vrot.lane.b32.xlu0 %v333, 126
    %v499 = vpop.permute.xlu0 %498
    %v500 = vsel %vm236, %v342, %v499
    %s501 = scalar_lea.vmem %s1, 12
    %v502 = vld [vmem:[%s501] sm:$0xf]
    %504 = vset.pattern.permute.xlu0 0
    %505 = vperm.xlu0 %504, %v502
    %v506 = vpop.permute.xlu0 %505
    %v508 = vsel %vm70, %v506, %v500
    %v509 = vld [vmem:[%s246] sm:$0xff]
    %v511 = vsel %vm80, %v509, 0
    %v514 = vsel %vm84, %v508, 0
    %516 = vmatprep.subr.mxu0 0.0
    %517 = vmatpush1.msra.mxu0 %v514
    %518 = vmatprep.subr.mxu0 0.0
    %519 = vmatpush1.msra.mxu0 0.0
    %520 = vmatprep.subr.mxu0 0.0
    %521 = vmatpush1.msra.mxu0 0.0
    %522 = vmatprep.subr.mxu0 0.0
    %523 = vmatpush1.msra.mxu0 0.0
    %524 = vmatprep.subr.mxu0 0.0
    %525 = vmatpush1.msra.mxu0 0.0
    %526 = vmatprep.subr.mxu0 0.0
    %527 = vmatpush1.msra.mxu0 0.0
    %528 = vmatprep.subr.mxu0 0.0
    %529 = vmatpush1.msra.mxu0 0.0
    %530 = vmatprep.subr.mxu0 0.0
    %531 = vmatpush1.msra.mxu0 0.0
    %532 = vmatprep.subr.mxu0 0.0
    %533 = vmatpush1.msra.mxu0 0.0
    %534 = vmatprep.subr.mxu0 0.0
    %535 = vmatpush1.msra.mxu0 0.0
    %536 = vmatprep.subr.mxu0 0.0
    %537 = vmatpush1.msra.mxu0 0.0
    %538 = vmatprep.subr.mxu0 0.0
    %539 = vmatpush1.msra.mxu0 0.0
    %540 = vmatprep.subr.mxu0 0.0
    %541 = vmatpush1.msra.mxu0 0.0
    %542 = vmatprep.subr.mxu0 0.0
    %543 = vmatpush1.msra.mxu0 0.0
    %544 = vmatprep.subr.mxu0 0.0
    %545 = vmatpush1.msra.mxu0 0.0
    %546 = vmatprep.subr.mxu0 0.0
    %547 = vmatpush1.msra.mxu0 0.0
    %548 = vmatprep.subr.mxu0 0.0
    %549 = vmatpush1.msra.mxu0 0.0
    %550 = vmatprep.subr.mxu0 0.0
    %551 = vmatpush1.msra.mxu0 0.0
    %552 = vmatprep.subr.mxu0 0.0
    %553 = vmatpush1.msra.mxu0 0.0
    %554 = vmatprep.subr.mxu0 0.0
    %555 = vmatpush1.msra.mxu0 0.0
    %556 = vmatprep.subr.mxu0 0.0
    %557 = vmatpush1.msra.mxu0 0.0
    %558 = vmatprep.subr.mxu0 0.0
    %559 = vmatpush1.msra.mxu0 0.0
    %560 = vmatprep.subr.mxu0 0.0
    %561 = vmatpush1.msra.mxu0 0.0
    %562 = vmatprep.subr.mxu0 0.0
    %563 = vmatpush1.msra.mxu0 0.0
    %564 = vmatprep.subr.mxu0 0.0
    %565 = vmatpush1.msra.mxu0 0.0
    %566 = vmatprep.subr.mxu0 0.0
    %567 = vmatpush1.msra.mxu0 0.0
    %568 = vmatprep.subr.mxu0 0.0
    %569 = vmatpush1.msra.mxu0 0.0
    %570 = vmatprep.subr.mxu0 0.0
    %571 = vmatpush1.msra.mxu0 0.0
    %572 = vmatprep.subr.mxu0 0.0
    %573 = vmatpush1.msra.mxu0 0.0
    %574 = vmatprep.subr.mxu0 0.0
    %575 = vmatpush1.msra.mxu0 0.0
    %576 = vmatprep.subr.mxu0 0.0
    %577 = vmatpush1.msra.mxu0 0.0
    %578 = vmatprep.subr.mxu0 0.0
    %579 = vmatpush1.msra.mxu0 0.0
    %580 = vmatprep.mubr.f32.mxu0 0.0
    %581 = vmatmul.mubr.f32.gmra.mrb[0].mxu0 %v511
    %v582 = vpop.f32.mrb[0].mxu0
    %v583 = vadd.f32 0.0, %v582
    %v584 = vpop.f32.mrb[0].mxu0
    %585 = vdwg.mxu0
    %v586 = vadd.f32 %v495, %v583
    %v587 = vadd.f32 %v586, %v328
    %s588 = scalar_lea.vmem [#allocation3], 8
    %589 = vst [vmem:[%s588] sm:$0xff] %v587
    // Predicated region
    $region59: #{tpu_custom_call.1} parent=1 // pred_check
      _
    $region60: #{tpu_custom_call.1} parent=1 // pred_check_branch
      %591 = sbr.rel (0) target = $region62
    $region61: #{tpu_custom_call.1} parent=1 // pred_region
      %s593 = ssub.s32 256, 256
      %594 = vsyncadd [#allocation4], %s593
      %s595 = sshll.u32 [#allocation3], 4
      %s596 = int_to_ptr.vmem [resolvable:$true] %s595
      %601 = dma.vmem_to_hbm [thread:$0]  %s596, 256, %s4, [#allocation4], 128, 128, 8
    $region62: #{tpu_custom_call.1} parent=1 // pred_fallthru
      _
    // Predicated region
    $region63: #{tpu_custom_call.1} parent=1 // pred_check
      _
    $region64: #{tpu_custom_call.1} parent=1 // pred_check_branch
      %603 = sbr.rel (0) target = $region66
    $region65: #{tpu_custom_call.1} parent=1 // pred_region
      %604 = dma.done [#allocation4], 256
    $region66: #{tpu_custom_call.1} parent=1 // pred_fallthru
      _
    %605 = vsyncpa [#allocation4], 1

</llo_original>
